<compile_context>
chip_gen: v7x
topology: tpu7x:2x2x1
jax: 0.10.0
libtpu: 0.0.40
codegen_flags: <defaults>
</compile_context>

<pallas_src>
import jax
import jax.numpy as jnp
from jax.experimental import pallas as pl
from jax.experimental.pallas import tpu as pltpu

SELU_ALPHA = 1.6732632423543772848170429916717
SELU_SCALE = 1.0507009873554804934193349852946

_NEG_BIG = -1e30   # additive mask value (finite: avoids inf*0 -> NaN in the FC dot)
_HALO = 16         # halo rows per sequence block (bf16 packed-tile aligned); needs Kmax-1 <= 16


def _selu(x):
    return SELU_SCALE * jnp.where(x > 0, x, SELU_ALPHA * (jnp.exp(x) - 1.0))


def fused_conv_head_kernel(x_ref, xh_ref, wp_ref, bias_ref, mask_ref, fcw_ref, fcb_ref,
                           logit_ref, feat_ref):
    # x_ref:     (Bt, St, Ep)    bf16 embedded tokens, one (batch, seq) tile
    # xh_ref:    (Bt, HALO, Ep)  bf16 halo = first HALO rows of the *next* seq block
    # wp_ref:    (Kmax*Ep, nFp)  bf16 packed conv weights, tap-major, zero-padded
    # bias_ref:  (1, nFp)        f32  packed conv biases
    # mask_ref:  (St, nFp)       f32  additive mask: 0 on valid conv positions, -1e30 otherwise
    # fcw_ref:   (1, nFp)        f32  fc weight row (zero on padded lanes)
    # fcb_ref:   (1, 1)          f32  fc bias
    # logit_ref: (Bt, 1)         f32  fc(features)  (sigmoid / BCE run in the JAX epilogue)
    # feat_ref:  (Bt, nFp)       f32  running max over sequence blocks (VMEM scratch)
    s = pl.program_id(1)

    @pl.when(s == 0)
    def _init():
        feat_ref[...] = jnp.full(feat_ref.shape, _NEG_BIG, dtype=feat_ref.dtype)

    Bt, St, Ep = x_ref.shape
    Se = St + xh_ref.shape[1]
    Re = Bt * Se
    nFp = wp_ref.shape[1]
    Kmax = wp_ref.shape[0] // Ep

    # bf16 feeds the MXU directly (no f32 round trip of x).  Tap shifts are applied to
    # the f32 MXU products with sublane rolls, so no packed-bf16 relayouts are needed:
    #     acc[r, :] = sum_dk x[r+dk, :] @ W[dk] = sum_dk roll(x @ W[dk], shift=-dk)[r, :]
    # The halo rows keep every kept row's window inside its own example; roll wrap only
    # lands on rows that are sliced away (halo rows) or killed by the additive mask.
    xe = jnp.concatenate([x_ref[...], xh_ref[...]], axis=1)          # (Bt, Se, Ep) bf16
    xef = xe.reshape(Re, Ep)                                         # tile-aligned (Se % 16 == 0)

    acc = jnp.dot(xef, wp_ref[0:Ep, :], preferred_element_type=jnp.float32)   # (Re, nFp)
    for dk in range(1, Kmax):
        p = jnp.dot(xef, wp_ref[dk * Ep:(dk + 1) * Ep, :],
                    preferred_element_type=jnp.float32)
        acc = acc + pltpu.roll(p, shift=Re - dk, axis=0)             # row r picks up p[r + dk]
    # TODO(synk): once packed-bf16 sublane shifts are confirmed in Mosaic, shift the bf16
    # input instead of the f32 products (Ep*2 vs nFp*4 bytes/row of XLU traffic), and
    # group taps to keep the v6e/v7x 256-deep MXU full when E < 128.

    acc = acc.reshape(Bt, Se, nFp)[:, :St, :]                        # drop halo rows
    acc = _selu(acc + bias_ref[...])
    acc = acc + mask_ref[...]                                        # kill invalid positions / padded lanes

    # Running max over sequence blocks.
    feat_ref[...] = jnp.maximum(feat_ref[...], jnp.max(acc, axis=1))

    @pl.when(s == pl.num_programs(1) - 1)
    def _finish():
        # FC head: width-1 result -> VPU multiply + lane reduce (skip a skinny MXU op).
        feat = feat_ref[...]
        logits = jnp.sum(feat * fcw_ref[...], axis=-1, keepdims=True) + fcb_ref[...]
        logit_ref[...] = logits.astype(logit_ref.dtype)


def _round_up(x, m):
    return m * ((x + m - 1) // m)


def _vmem_limit_bytes():
    # Per-generation scoped-VMEM budget: physical capacity minus headroom
    # (~100 MiB on v5e/v6e's 128 MiB, ~50 MiB on v7x's 64 MiB).
    try:
        cap = int(getattr(pltpu.get_tpu_info(), "vmem_capacity_bytes", 0))
    except Exception:
        cap = 0
    if cap <= 0:
        return 64 * 1024 * 1024
    return int(min(cap - 8 * 1024 * 1024, (cap * 25) // 32))


def _pick_batch_tile(B):
    if B <= 8:
        return B   # toy path; TODO(synk): real batches want >=2 tiles to feed both v7x TCs
    # >= 2 batch tiles so both v7x TensorCores get work; 8-aligned for the (Bt, 1) output tile.
    return min(128, 8 * pl.cdiv(pl.cdiv(B, 2), 8))


def _pick_seq_tile(S):
    # 16-aligned (bf16 packed tiles) and bounded so VMEM stays flat in S.
    if S > 256:
        return 256
    return max(16, 16 * (S // 32))


def conv_encoder_forward(tokens, target, params, kernel_sizes):
    """ConvEncoder.forward: returns (y, loss) with unweighted BCE, inference-mode dropout."""
    # Embedding lookup stays as an XLA gather on a bf16 table (halves gather bytes).
    # TODO(synk): move the gather in-kernel (scalar-prefetch tokens into SMEM + row DMA from
    # an HBM-resident table) to drop one HBM round trip of x -- biggest payoff on v5e.
    x = params["embed"].astype(jnp.bfloat16)[tokens]                  # (B, S, E) bf16
    # TODO(synk): embed_dropout / fc_dropout are identity here (inference mode).
    B, S, E = x.shape
    Fm = params["convs"][0][0].shape[2]
    nF = Fm * len(kernel_sizes)
    Kmax = max(kernel_sizes)
    assert Kmax <= S, "conv kernel larger than sequence length"
    assert Kmax - 1 <= _HALO, "kernel sizes above 17 need a bigger halo"

    # Tiling: batch axis is `parallel` (megacore), sequence axis is an `arbitrary`
    # reduction carried by the running-max scratch, so VMEM does not grow with S.
    Bt = _pick_batch_tile(B)
    St = _pick_seq_tile(S)
    Ep = _round_up(E, 16)                   # keep per-tap weight slices packed-tile aligned
    nFp = _round_up(max(nF, 128), 128)      # lane-dense filter axis
    Spad = St * pl.cdiv(S, St)
    nb, ns = pl.cdiv(B, Bt), Spad // St

    if (Spad, Ep) != (S, E):
        x = jnp.pad(x, ((0, 0), (0, Spad - S), (0, Ep - E)))

    # Pack every branch into one tap-major weight matrix, one bias row and one additive
    # mask (0 on valid conv positions, -1e30 on invalid positions and padded lanes).
    wp = jnp.zeros((Kmax * Ep, nFp), jnp.float32)
    bias = jnp.zeros((1, nFp), jnp.float32)
    mask = jnp.full((Spad, nFp), _NEG_BIG, jnp.float32)
    fcw = jnp.zeros((1, nFp), jnp.float32)
    for i, (k, (w, b)) in enumerate(zip(kernel_sizes, params["convs"])):
        lo = i * Fm
        for dk in range(k):
            wp = wp.at[dk * Ep:dk * Ep + E, lo:lo + Fm].set(w[dk])
        bias = bias.at[:, lo:lo + Fm].set(b)
        mask = mask.at[:S - k + 1, lo:lo + Fm].set(0.0)
    wp = wp.astype(jnp.bfloat16)
    fcw = fcw.at[:, :nF].set(params["fc_w"].reshape(1, nF))
    fcb = params["fc_b"].reshape(1, 1).astype(jnp.float32)

    halo_step = St // _HALO
    last_halo_blk = Spad // _HALO - 1

    fused = pl.pallas_call(
        fused_conv_head_kernel,
        out_shape=jax.ShapeDtypeStruct((B, 1), jnp.float32),
        grid_spec=pltpu.PrefetchScalarGridSpec(
            num_scalar_prefetch=0,
            grid=(nb, ns),
            in_specs=[
                pl.BlockSpec((Bt, St, Ep), lambda b, s: (b, s, 0)),        # x tile
                pl.BlockSpec((Bt, _HALO, Ep),                               # next-block halo
                             lambda b, s: (b, jnp.minimum((s + 1) * halo_step,
                                                          last_halo_blk), 0)),
                pl.BlockSpec((Kmax * Ep, nFp), lambda b, s: (0, 0)),        # packed conv W
                pl.BlockSpec((1, nFp), lambda b, s: (0, 0)),                # packed conv bias
                pl.BlockSpec((St, nFp), lambda b, s: (s, 0)),               # additive mask
                pl.BlockSpec((1, nFp), lambda b, s: (0, 0)),                # fc weight row
                pl.BlockSpec((1, 1), lambda b, s: (0, 0)),                  # fc bias
            ],
            out_specs=pl.BlockSpec((Bt, 1), lambda b, s: (b, 0)),           # logits
            scratch_shapes=[pltpu.VMEM((Bt, nFp), jnp.float32)],            # running-max feat
        ),
        compiler_params=pltpu.CompilerParams(
            dimension_semantics=("parallel", "arbitrary"),
            vmem_limit_bytes=_vmem_limit_bytes(),
        ),
    )
    logits = fused(x, x, wp, bias, mask, fcw, fcb)[:, 0]

    y = jax.nn.sigmoid(logits)
    t = target.astype(jnp.float32)
    # Stable unweighted BCE from logits: softplus(z) - t*z == -[t*log(y) + (1-t)*log(1-y)].
    loss = jnp.mean(jax.nn.softplus(logits) - t * logits)
    return y, loss


def _reference_forward(tokens, target, params, kernel_sizes):
    # Pure-JAX f32 reference mirroring the PyTorch module for correctness checks.
    x = params["embed"][tokens].astype(jnp.float32)                   # (B, S, E)
    B, S, E = x.shape
    feats = []
    for ksize, (w, b) in zip(kernel_sizes, params["convs"]):
        L = S - ksize + 1
        acc = jnp.zeros((B, L, w.shape[2]), jnp.float32)
        for dk in range(ksize):
            acc = acc + jnp.einsum("ble,ef->blf", x[:, dk:dk + L, :], w[dk])
        acc = _selu(acc + b)
        feats.append(jnp.max(acc, axis=1))
    feat = jnp.concatenate(feats, axis=1)
    logits = feat @ params["fc_w"] + params["fc_b"]
    y = jax.nn.sigmoid(logits).squeeze(-1)
    t = target.astype(jnp.float32)
    loss = -jnp.mean(t * jnp.log(y) + (1 - t) * jnp.log(1 - y))
    return y, loss


if __name__ == "__main__":
    # Small shapes consistent with the module (ConvEncoder with two conv branches).
    B, S = 2, 32                 # batch, sequence length (token ids)
    E = 32                       # embed_size
    Fm = 8                       # num_filter_maps
    kernel_sizes = [3, 5]
    vocab = 50                   # vocab_size + 2 in the module

    key = jax.random.PRNGKey(0)
    k_emb, k_tok, k_tgt, k_fcw, k_fcb, *k_convs = jax.random.split(
        key, 5 + 2 * len(kernel_sizes))

    params = {
        "embed": jax.random.normal(k_emb, (vocab, E), jnp.float32) * 0.1,
        "convs": [],
        # xavier-uniform-style fc init (deterministic; synthetic weights)
        "fc_w": jax.random.uniform(k_fcw, (Fm * len(kernel_sizes), 1), jnp.float32,
                                   minval=-0.3, maxval=0.3),
        "fc_b": jax.random.uniform(k_fcb, (1, 1), jnp.float32, minval=-0.1, maxval=0.1),
    }
    for i, ksize in enumerate(kernel_sizes):
        kw, kb = k_convs[2 * i], k_convs[2 * i + 1]
        # torch Conv1d weight is (F, E, K); stored transposed here as (K, E, F).
        w = jax.random.normal(kw, (ksize, E, Fm), jnp.float32) * 0.05
        b = jax.random.uniform(kb, (1, Fm), jnp.float32, minval=-0.05, maxval=0.05)
        params["convs"].append((w, b))

    tokens = jax.random.randint(k_tok, (B, S), 0, vocab, dtype=jnp.int32)
    target = jax.random.bernoulli(k_tgt, 0.5, (B,)).astype(jnp.float32)

    y, loss = conv_encoder_forward(tokens, target, params, kernel_sizes)
    jax.block_until_ready((y, loss))

    y_ref, loss_ref = _reference_forward(tokens, target, params, kernel_sizes)
    # bf16 MXU operands vs the all-f32 reference -> allow a few e-3 absolute error.
    assert jnp.allclose(y, y_ref, atol=5e-3), (y, y_ref)
    assert jnp.allclose(loss, loss_ref, atol=5e-3), (loss, loss_ref)
    assert bool(jnp.isfinite(loss))

    print("KERNEL_OK")
</pallas_src>

<mosaic_0001>
module attributes {stable_mosaic.version = 11 : i64} {
  func.func @fused_conv_head_kernel(%arg0: i32, %arg1: i32, %arg2: memref<2x16x32xbf16, #tpu.memory_space<vmem>>, %arg3: memref<2x16x32xbf16, #tpu.memory_space<vmem>>, %arg4: memref<160x128xbf16, #tpu.memory_space<vmem>>, %arg5: memref<1x128xf32, #tpu.memory_space<vmem>>, %arg6: memref<16x128xf32, #tpu.memory_space<vmem>>, %arg7: memref<1x128xf32, #tpu.memory_space<vmem>>, %arg8: memref<1x1xf32, #tpu.memory_space<vmem>>, %arg9: memref<2x1xf32, #tpu.memory_space<vmem>>, %arg10: memref<2x128xf32, #tpu.memory_space<vmem>>) attributes {dimension_semantics = [#tpu.dimension_semantics<parallel>, #tpu.dimension_semantics<arbitrary>], iteration_bounds = array<i64: 1, 2>, scalar_prefetch = 0 : i64, scratch_operands = 1 : i64, tpu.core_type = #tpu.core_type<tc>, window_params = [{transform_indices = @transform_0, window_bounds = array<i64: 2, 16, 32>}, {transform_indices = @transform_1, window_bounds = array<i64: 2, 16, 32>}, {pipeline_mode = #tpu.pipeline_mode<synchronous>, transform_indices = @transform_2, window_bounds = array<i64: 160, 128>}, {pipeline_mode = #tpu.pipeline_mode<synchronous>, transform_indices = @transform_3, window_bounds = array<i64: 1, 128>}, {transform_indices = @transform_4, window_bounds = array<i64: 16, 128>}, {pipeline_mode = #tpu.pipeline_mode<synchronous>, transform_indices = @transform_5, window_bounds = array<i64: 1, 128>}, {pipeline_mode = #tpu.pipeline_mode<synchronous>, transform_indices = @transform_6, window_bounds = array<i64: 1, 1>}, {transform_indices = @transform_7, window_bounds = array<i64: 2, 1>}]} {
    %c0_i32 = arith.constant 0 : i32
    %0 = arith.cmpi eq, %arg1, %c0_i32 : i32
    %1 = arith.extui %0 : i1 to i32
    %c0_i32_0 = arith.constant 0 : i32
    %2 = arith.cmpi ne, %1, %c0_i32_0 : i32
    scf.if %2 {
      %cst_30 = arith.constant -1.000000e+30 : f32
      %52 = vector.broadcast %cst_30 : f32 to vector<2x128xf32>
      %c0_31 = arith.constant 0 : index
      %c0_32 = arith.constant 0 : index
      %53 = vector.load %arg10[%c0_31, %c0_32] : memref<2x128xf32, #tpu.memory_space<vmem>>, vector<2x128xf32>
      tpu.vector_store %arg10[%c0_31, %c0_32], %52 {strides = array<i32>} : memref<2x128xf32, #tpu.memory_space<vmem>>, vector<2x128xf32>,
    } else {
    }
    %c0 = arith.constant 0 : index
    %c0_1 = arith.constant 0 : index
    %c0_2 = arith.constant 0 : index
    %3 = vector.load %arg2[%c0, %c0_1, %c0_2] : memref<2x16x32xbf16, #tpu.memory_space<vmem>>, vector<2x16x32xbf16>
    %c0_3 = arith.constant 0 : index
    %c0_4 = arith.constant 0 : index
    %c0_5 = arith.constant 0 : index
    %4 = vector.load %arg3[%c0_3, %c0_4, %c0_5] : memref<2x16x32xbf16, #tpu.memory_space<vmem>>, vector<2x16x32xbf16>
    %5 = tpu.concatenate %3, %4 in 1 : vector<2x16x32xbf16>, vector<2x16x32xbf16> -> vector<2x32x32xbf16>
    %6 = vector.shape_cast %5 : vector<2x32x32xbf16> to vector<64x32xbf16>
    %c0_6 = arith.constant 0 : index
    %c0_7 = arith.constant 0 : index
    %7 = vector.load %arg4[%c0_6, %c0_7] : memref<160x128xbf16, #tpu.memory_space<vmem>>, vector<32x128xbf16>
    %cst = arith.constant dense<0.000000e+00> : vector<64x128xf32>
    %8 = tpu.matmul %6, %7, %cst {dimension_numbers = #tpu.dot_dimension_numbers<[1], [0], [0], [1], [0, 0, 1, 1], [], []>} : vector<64x32xbf16>, vector<32x128xbf16>, vector<64x128xf32> -> vector<64x128xf32>
    %c32 = arith.constant 32 : index
    %c0_8 = arith.constant 0 : index
    %9 = vector.load %arg4[%c32, %c0_8] : memref<160x128xbf16, #tpu.memory_space<vmem>>, vector<32x128xbf16>
    %cst_9 = arith.constant dense<0.000000e+00> : vector<64x128xf32>
    %10 = tpu.matmul %6, %9, %cst_9 {dimension_numbers = #tpu.dot_dimension_numbers<[1], [0], [0], [1], [0, 0, 1, 1], [], []>} : vector<64x32xbf16>, vector<32x128xbf16>, vector<64x128xf32> -> vector<64x128xf32>
    %c63_i32 = arith.constant 63 : i32
    %11 = tpu.dynamic_rotate %10 by %c63_i32 dim 0 : vector<64x128xf32>, i32 -> vector<64x128xf32>
    %12 = arith.addf %8, %11 : vector<64x128xf32>
    %c64 = arith.constant 64 : index
    %c0_10 = arith.constant 0 : index
    %13 = vector.load %arg4[%c64, %c0_10] : memref<160x128xbf16, #tpu.memory_space<vmem>>, vector<32x128xbf16>
    %cst_11 = arith.constant dense<0.000000e+00> : vector<64x128xf32>
    %14 = tpu.matmul %6, %13, %cst_11 {dimension_numbers = #tpu.dot_dimension_numbers<[1], [0], [0], [1], [0, 0, 1, 1], [], []>} : vector<64x32xbf16>, vector<32x128xbf16>, vector<64x128xf32> -> vector<64x128xf32>
    %c62_i32 = arith.constant 62 : i32
    %15 = tpu.dynamic_rotate %14 by %c62_i32 dim 0 : vector<64x128xf32>, i32 -> vector<64x128xf32>
    %16 = arith.addf %12, %15 : vector<64x128xf32>
    %c96 = arith.constant 96 : index
    %c0_12 = arith.constant 0 : index
    %17 = vector.load %arg4[%c96, %c0_12] : memref<160x128xbf16, #tpu.memory_space<vmem>>, vector<32x128xbf16>
    %cst_13 = arith.constant dense<0.000000e+00> : vector<64x128xf32>
    %18 = tpu.matmul %6, %17, %cst_13 {dimension_numbers = #tpu.dot_dimension_numbers<[1], [0], [0], [1], [0, 0, 1, 1], [], []>} : vector<64x32xbf16>, vector<32x128xbf16>, vector<64x128xf32> -> vector<64x128xf32>
    %c61_i32 = arith.constant 61 : i32
    %19 = tpu.dynamic_rotate %18 by %c61_i32 dim 0 : vector<64x128xf32>, i32 -> vector<64x128xf32>
    %20 = arith.addf %16, %19 : vector<64x128xf32>
    %c128 = arith.constant 128 : index
    %c0_14 = arith.constant 0 : index
    %21 = vector.load %arg4[%c128, %c0_14] : memref<160x128xbf16, #tpu.memory_space<vmem>>, vector<32x128xbf16>
    %cst_15 = arith.constant dense<0.000000e+00> : vector<64x128xf32>
    %22 = tpu.matmul %6, %21, %cst_15 {dimension_numbers = #tpu.dot_dimension_numbers<[1], [0], [0], [1], [0, 0, 1, 1], [], []>} : vector<64x32xbf16>, vector<32x128xbf16>, vector<64x128xf32> -> vector<64x128xf32>
    %c60_i32 = arith.constant 60 : i32
    %23 = tpu.dynamic_rotate %22 by %c60_i32 dim 0 : vector<64x128xf32>, i32 -> vector<64x128xf32>
    %24 = arith.addf %20, %23 : vector<64x128xf32>
    %25 = vector.shape_cast %24 : vector<64x128xf32> to vector<2x32x128xf32>
    %26 = vector.extract_strided_slice %25 {offsets = [0, 0, 0], sizes = [2, 16, 128], strides = [1, 1, 1]} : vector<2x32x128xf32> to vector<2x16x128xf32>
    %c0_16 = arith.constant 0 : index
    %c0_17 = arith.constant 0 : index
    %27 = vector.load %arg5[%c0_16, %c0_17] : memref<1x128xf32, #tpu.memory_space<vmem>>, vector<1x128xf32>
    %28 = vector.shape_cast %27 : vector<1x128xf32> to vector<1x1x128xf32>
    %29 = vector.broadcast %28 : vector<1x1x128xf32> to vector<2x16x128xf32>
    %30 = arith.addf %26, %29 : vector<2x16x128xf32>
    %cst_18 = arith.constant 0.000000e+00 : f32
    %31 = vector.broadcast %cst_18 : f32 to vector<2x16x128xf32>
    %32 = arith.cmpf ogt, %30, %31 : vector<2x16x128xf32>
    %33 = math.exp %30 : vector<2x16x128xf32>
    %cst_19 = arith.constant 1.000000e+00 : f32
    %34 = vector.broadcast %cst_19 : f32 to vector<2x16x128xf32>
    %35 = arith.subf %33, %34 : vector<2x16x128xf32>
    %cst_20 = arith.constant 1.67326319 : f32
    %36 = vector.broadcast %cst_20 : f32 to vector<2x16x128xf32>
    %37 = arith.mulf %36, %35 : vector<2x16x128xf32>
    %38 = arith.select %32, %30, %37 : vector<2x16x128xi1>, vector<2x16x128xf32>
    %cst_21 = arith.constant 1.05070102 : f32
    %39 = vector.broadcast %cst_21 : f32 to vector<2x16x128xf32>
    %40 = arith.mulf %39, %38 : vector<2x16x128xf32>
    %c0_22 = arith.constant 0 : index
    %c0_23 = arith.constant 0 : index
    %41 = vector.load %arg6[%c0_22, %c0_23] : memref<16x128xf32, #tpu.memory_space<vmem>>, vector<16x128xf32>
    %42 = vector.shape_cast %41 : vector<16x128xf32> to vector<1x16x128xf32>
    %43 = vector.broadcast %42 : vector<1x16x128xf32> to vector<2x16x128xf32>
    %44 = arith.addf %40, %43 : vector<2x16x128xf32>
    %c0_24 = arith.constant 0 : index
    %c0_25 = arith.constant 0 : index
    %45 = vector.load %arg10[%c0_24, %c0_25] : memref<2x128xf32, #tpu.memory_space<vmem>>, vector<2x128xf32>
    %cst_26 = arith.constant dense<0xFF800000> : vector<2x128xf32>
    %46 = vector.multi_reduction <maximumf>, %44, %cst_26 [1] : vector<2x16x128xf32> to vector<2x128xf32>
    %47 = arith.maximumf %45, %46 : vector<2x128xf32>
    %c0_27 = arith.constant 0 : index
    %c0_28 = arith.constant 0 : index
    %48 = vector.load %arg10[%c0_27, %c0_28] : memref<2x128xf32, #tpu.memory_space<vmem>>, vector<2x128xf32>
    tpu.vector_store %arg10[%c0_27, %c0_28], %47 {strides = array<i32>} : memref<2x128xf32, #tpu.memory_space<vmem>>, vector<2x128xf32>,
    %c1_i32 = arith.constant 1 : i32
    %49 = arith.cmpi eq, %arg1, %c1_i32 : i32
    %50 = arith.extui %49 : i1 to i32
    %c0_i32_29 = arith.constant 0 : i32
    %51 = arith.cmpi ne, %50, %c0_i32_29 : i32
    scf.if %51 {
      %c0_30 = arith.constant 0 : index
      %c0_31 = arith.constant 0 : index
      %52 = vector.load %arg10[%c0_30, %c0_31] : memref<2x128xf32, #tpu.memory_space<vmem>>, vector<2x128xf32>
      %c0_32 = arith.constant 0 : index
      %c0_33 = arith.constant 0 : index
      %53 = vector.load %arg7[%c0_32, %c0_33] : memref<1x128xf32, #tpu.memory_space<vmem>>, vector<1x128xf32>
      %54 = vector.broadcast %53 : vector<1x128xf32> to vector<2x128xf32>
      %55 = arith.mulf %52, %54 : vector<2x128xf32>
      %cst_34 = arith.constant dense<0.000000e+00> : vector<2xf32>
      %56 = vector.multi_reduction <add>, %55, %cst_34 [1] : vector<2x128xf32> to vector<2xf32>
      %57 = vector.shape_cast %56 : vector<2xf32> to vector<2x1xf32>
      %c0_35 = arith.constant 0 : index
      %c0_36 = arith.constant 0 : index
      %58 = vector.load %arg8[%c0_35, %c0_36] : memref<1x1xf32, #tpu.memory_space<vmem>>, vector<1x1xf32>
      %59 = vector.broadcast %58 : vector<1x1xf32> to vector<2x1xf32>
      %60 = arith.addf %57, %59 : vector<2x1xf32>
      %c0_37 = arith.constant 0 : index
      %c0_38 = arith.constant 0 : index
      %61 = vector.load %arg9[%c0_37, %c0_38] : memref<2x1xf32, #tpu.memory_space<vmem>>, vector<2x1xf32>
      tpu.vector_store %arg9[%c0_37, %c0_38], %60 {strides = array<i32>} : memref<2x1xf32, #tpu.memory_space<vmem>>, vector<2x1xf32>,
    } else {
    }
    return
  }
  func.func @transform_0(%arg0: i32, %arg1: i32) -> (i32, i32, i32) {
    %c0_i32 = arith.constant 0 : i32
    %c0_i32_0 = arith.constant 0 : i32
    return %arg0, %arg1, %c0_i32 : i32, i32, i32
  }
  func.func @transform_1(%arg0: i32, %arg1: i32) -> (i32, i32, i32) {
    %c1_i32 = arith.constant 1 : i32
    %0 = arith.addi %arg1, %c1_i32 : i32
    %c1_i32_0 = arith.constant 1 : i32
    %1 = arith.muli %0, %c1_i32_0 : i32
    %c1_i32_1 = arith.constant 1 : i32
    %2 = arith.minsi %1, %c1_i32_1 : i32
    %c0_i32 = arith.constant 0 : i32
    %c0_i32_2 = arith.constant 0 : i32
    return %arg0, %2, %c0_i32 : i32, i32, i32
  }
  func.func @transform_2(%arg0: i32, %arg1: i32) -> (i32, i32) {
    %c0_i32 = arith.constant 0 : i32
    %c0_i32_0 = arith.constant 0 : i32
    %c0_i32_1 = arith.constant 0 : i32
    return %c0_i32, %c0_i32_0 : i32, i32
  }
  func.func @transform_3(%arg0: i32, %arg1: i32) -> (i32, i32) {
    %c0_i32 = arith.constant 0 : i32
    %c0_i32_0 = arith.constant 0 : i32
    %c0_i32_1 = arith.constant 0 : i32
    return %c0_i32, %c0_i32_0 : i32, i32
  }
  func.func @transform_4(%arg0: i32, %arg1: i32) -> (i32, i32) {
    %c0_i32 = arith.constant 0 : i32
    %c0_i32_0 = arith.constant 0 : i32
    return %arg1, %c0_i32 : i32, i32
  }
  func.func @transform_5(%arg0: i32, %arg1: i32) -> (i32, i32) {
    %c0_i32 = arith.constant 0 : i32
    %c0_i32_0 = arith.constant 0 : i32
    %c0_i32_1 = arith.constant 0 : i32
    return %c0_i32, %c0_i32_0 : i32, i32
  }
  func.func @transform_6(%arg0: i32, %arg1: i32) -> (i32, i32) {
    %c0_i32 = arith.constant 0 : i32
    %c0_i32_0 = arith.constant 0 : i32
    %c0_i32_1 = arith.constant 0 : i32
    return %c0_i32, %c0_i32_0 : i32, i32
  }
  func.func @transform_7(%arg0: i32, %arg1: i32) -> (i32, i32) {
    %c0_i32 = arith.constant 0 : i32
    %c0_i32_0 = arith.constant 0 : i32
    return %arg0, %c0_i32 : i32, i32
  }
}

</mosaic_0001>

<llo_original>
// kernel: tpu_custom_call.1
$region0: #{tpu_custom_call.1}
  #allocation0 [shape = 'u32[]', space=smem, size = 0x4, offset = 0x4, fixed_abs, tag = 'smem constant byte address 0x4 - core index']
  #allocation1 [shape = 'u32[144,128]{1,0:T(1,128)}', space=vmem, size = 0x12000, scoped, tag = 'internal scratch']
  #allocation2 [shape = 'f32[2,128]{1,0:T(2,128)}', space=vmem, size = 0x400, scoped, tag = 'scratch operand']
  #allocation3 [shape = 'f32[1,1]{1,0:T(1,128)S(1)}', space=vmem, size = 0x200, scoped, tag = 'scoped memory for tpu_custom_call.1']
  #allocation15 [shape = 's32[]', space=sflag, size = 0x4, offset = 0, fixed_abs, tag = 'sflag constant byte address 0x0 - dummy sync flag']
  #allocation17 [shape = 's32[]', space=sflag, size = 0x4, offset = 0, fixed_abs, tag = 'sflag constant byte address 0x0 - dummy sync flag']
  %s0 = inlined_call_operand.hbm [shape: bf16[2,32,32], index: 0, kind: input, shape index: {}]
  %s1 = inlined_call_operand.hbm [shape: bf16[2,32,32], index: 1, kind: input, shape index: {}]
  %s2 = inlined_call_operand.hbm [shape: bf16[160,128], index: 2, kind: input, shape index: {}]
  %s3 = inlined_call_operand.hbm [shape: f32[1,128], index: 3, kind: input, shape index: {}]
  %s4 = inlined_call_operand.hbm [shape: f32[32,128], index: 4, kind: input, shape index: {}]
  %s5 = inlined_call_operand.hbm [shape: f32[1,128], index: 5, kind: input, shape index: {}]
  %s6 = inlined_call_operand.<no memory space> [shape: f32[1,1], index: 6, kind: input, shape index: {}]
  %s7 = inlined_call_operand.hbm [shape: f32[2,1], index: 7, kind: output, shape index: {}]
  %s8 = sld [smem:[#allocation0]]
  $region93: #{tpu_custom_call.1} parent=0
    _
  %s10 = ssub.s32 1, %s8
  %s11 = scalar_select 0, %s10, %s8
  %v12 = vstv %s6
  %13 = vst [vmem:[#allocation3] sm:$0x1] %v12
  $region1: #{tpu_custom_call.1} parent=0
    #allocation4 [shape = 'u8[16384]{0}', space=vmem, size = 0x4000, scoped, tag = 'input window, operand 0']
    #allocation5 [shape = 's32[2]{0}', space=sflag, size = 0x8, scoped, tag = 'scoped memory for tpu_custom_call.1']
    #allocation6 [shape = 's32[2]{0}', space=sflag, size = 0x8, scoped, tag = 'scoped memory for tpu_custom_call.1']
    #allocation7 [shape = 'u8[16384]{0}', space=vmem, size = 0x4000, scoped, tag = 'input window, operand 1']
    #allocation8 [shape = 's32[2]{0}', space=sflag, size = 0x8, scoped, tag = 'scoped memory for tpu_custom_call.1']
    #allocation9 [shape = 'u8[40960]{0}', space=vmem, size = 0xa000, scoped, tag = 'input window, operand 2, single buffered']
    #allocation10 [shape = 'u8[512]{0}', space=vmem, size = 0x400, scoped, tag = 'input window, operand 3, single buffered']
    #allocation11 [shape = 's32[1]{0}', space=sflag, size = 0x4, scoped, tag = 'scoped memory for tpu_custom_call.1']
    #allocation12 [shape = 'u8[16384]{0}', space=vmem, size = 0x4000, scoped, tag = 'input window, operand 4']
    #allocation13 [shape = 'u8[512]{0}', space=vmem, size = 0x400, scoped, tag = 'input window, operand 5, single buffered']
    #allocation14 [shape = 'u8[1024]{0}', space=vmem, size = 0x400, scoped, tag = 'output window, operand 0, single buffered']
    %14 = vsyncpa [#allocation5], 0
    %s15 = scalar_lea.sflag [#allocation5], 1
    %16 = vsyncpa %s15, 0
    %17 = vsyncpa [#allocation8], 0
    %s18 = scalar_lea.sflag [#allocation8], 1
    %19 = vsyncpa %s18, 0
    %20 = vsyncpa [#allocation11], 0
    %21 = vsyncpa [#allocation6], 0
    loop: start=0, step=1, limit=4
    $region2: #{tpu_custom_call.1} parent=1 // loop_pre_header
      _
    $region3: #{tpu_custom_call.1} parent=1 // loop_header
      %s23 = sphi 0, %s27
      %p24 = scmp.ge.s32.totalorder %s23, 4
      %s30 = sphi 0, %s42
      %s31 = sphi 0, %s38
      %s32 = sphi 0, %s30
      %s33 = sphi 0, %s31
      %s34 = sphi 0, %s32
      %s35 = sphi 0, %s33
      %s47 = sphi 0, %s49
      %s50 = sphi 0, %s47
      %s51 = sphi 0, %s50
      %s67 = sphi 0, %s51
      %s81 = sphi 0, %s83
      %s84 = sphi 0, %s81
      %s85 = sphi 0, %s84
      %s101 = sphi 0, %s85
      %s105 = sphi 0, %s105
      %s107 = sphi 0, %s105
      %s108 = sphi 0, %s107
      %s122 = sphi 0, %s108
      %s126 = sphi 0, %s126
      %s128 = sphi 0, %s126
      %s129 = sphi 0, %s128
      %s143 = sphi 0, %s129
      %s149 = sphi 0, %s151
      %s152 = sphi 0, %s149
      %s153 = sphi 0, %s152
      %s169 = sphi 0, %s153
      %s173 = sphi 0, %s173
      %s175 = sphi 0, %s173
      %s176 = sphi 0, %s175
      %s190 = sphi 0, %s176
      %s194 = sphi 0, %s194
      %s196 = sphi 0, %s194
      %s197 = sphi 0, %s196
      %s211 = sphi 0, %s197
      %s217 = sphi 0, %s219
      %s220 = sphi 0, %s217
      %s221 = sphi 0, %s220
      %s237 = sphi 0, %s221
    $region4: #{tpu_custom_call.1} parent=1 // loop_header_branch
      %26 = sbr.rel (%p24) target = $region8
    $region5: #{tpu_custom_call.1} parent=1 // loop_body
      %s28 = ssub.s32 %s23, 1
      %s29 = ssub.s32 %s23, 2
      %s36 = sadd.s32 1, %s31
      %p37 = scmp.ge.s32.totalorder %s36, 2
      %s38 = scalar_select %p37, 0, %s36
      %s39 = sadd.s32 1, %s30
      %s40 = scalar_select %p37, %s39, %s30
      %p41 = scmp.ge.s32.totalorder %s40, 1
      %s42 = scalar_select %p41, 0, %s40
      %s43 = ssub.s32 %s30, %s42
      %s44 = ssub.s32 %s31, %s38
      %s45 = sor.u32 %s43, %s44
      %p46 = scmp.eq.s32.totalorder %s45, 0
      %s48 = sadd.s32 %s47, 1
      %s49 = scalar_select %p46, %s47, %s48
      %p52 = pneg %p46
      %p53 = scmp.eq.s32.totalorder %s23, 1
      %p54 = por %p52, %p53
      %p55 = scmp.ne.s32.totalorder %s47, %s50
      %p56 = scmp.eq.s32.totalorder %s23, 0
      %p57 = por %p55, %p56
      %p58 = scmp.ne.s32.totalorder %s47, %s50
      %p59 = scmp.eq.s32.totalorder %s28, 1
      %p60 = por %p58, %p59
      %p61 = scmp.ne.s32.totalorder %s50, %s51
      %p62 = scmp.eq.s32.totalorder %s28, 0
      %p63 = por %p61, %p62
      %p64 = scmp.ne.s32.totalorder %s50, %s51
      %p65 = scmp.eq.s32.totalorder %s29, 1
      %p66 = por %p64, %p65
      %p68 = scmp.ne.s32.totalorder %s51, %s67
      %p69 = scmp.eq.s32.totalorder %s29, 0
      %p70 = por %p68, %p69
      %s71 = sadd.s32 %s31, 1
      %p72 = scmp.lt.s32.totalorder %s71, 1
      %s73 = scalar_select %p72, %s71, 1
      %s74 = sadd.s32 %s38, 1
      %p75 = scmp.lt.s32.totalorder %s74, 1
      %s76 = scalar_select %p75, %s74, 1
      %s77 = ssub.s32 %s30, %s42
      %s78 = ssub.s32 %s73, %s76
      %s79 = sor.u32 %s77, %s78
      %p80 = scmp.eq.s32.totalorder %s79, 0
      %s82 = sadd.s32 %s81, 1
      %s83 = scalar_select %p80, %s81, %s82
      %p86 = pneg %p80
      %p87 = scmp.eq.s32.totalorder %s23, 1
      %p88 = por %p86, %p87
      %p89 = scmp.ne.s32.totalorder %s81, %s84
      %p90 = scmp.eq.s32.totalorder %s23, 0
      %p91 = por %p89, %p90
      %p92 = scmp.ne.s32.totalorder %s81, %s84
      %p93 = scmp.eq.s32.totalorder %s28, 1
      %p94 = por %p92, %p93
      %p95 = scmp.ne.s32.totalorder %s84, %s85
      %p96 = scmp.eq.s32.totalorder %s28, 0
      %p97 = por %p95, %p96
      %p98 = scmp.ne.s32.totalorder %s84, %s85
      %p99 = scmp.eq.s32.totalorder %s29, 1
      %p100 = por %p98, %p99
      %p102 = scmp.ne.s32.totalorder %s85, %s101
      %p103 = scmp.eq.s32.totalorder %s29, 0
      %p104 = por %p102, %p103
      %s106 = sadd.s32 %s105, 1
      %p109 = scmp.eq.s32.totalorder %s23, 1
      %p110 = scmp.ne.s32.totalorder %s105, %s107
      %p111 = scmp.eq.s32.totalorder %s23, 0
      %p112 = por %p110, %p111
      %p113 = scmp.ne.s32.totalorder %s105, %s107
      %p114 = scmp.eq.s32.totalorder %s28, 1
      %p115 = por %p113, %p114
      %p116 = scmp.ne.s32.totalorder %s107, %s108
      %p117 = scmp.eq.s32.totalorder %s28, 0
      %p118 = por %p116, %p117
      %p119 = scmp.ne.s32.totalorder %s107, %s108
      %p120 = scmp.eq.s32.totalorder %s29, 1
      %p121 = por %p119, %p120
      %p123 = scmp.ne.s32.totalorder %s108, %s122
      %p124 = scmp.eq.s32.totalorder %s29, 0
      %p125 = por %p123, %p124
      %s127 = sadd.s32 %s126, 1
      %p130 = scmp.eq.s32.totalorder %s23, 1
      %p131 = scmp.ne.s32.totalorder %s126, %s128
      %p132 = scmp.eq.s32.totalorder %s23, 0
      %p133 = por %p131, %p132
      %p134 = scmp.ne.s32.totalorder %s126, %s128
      %p135 = scmp.eq.s32.totalorder %s28, 1
      %p136 = por %p134, %p135
      %p137 = scmp.ne.s32.totalorder %s128, %s129
      %p138 = scmp.eq.s32.totalorder %s28, 0
      %p139 = por %p137, %p138
      %p140 = scmp.ne.s32.totalorder %s128, %s129
      %p141 = scmp.eq.s32.totalorder %s29, 1
      %p142 = por %p140, %p141
      %p144 = scmp.ne.s32.totalorder %s129, %s143
      %p145 = scmp.eq.s32.totalorder %s29, 0
      %p146 = por %p144, %p145
      %s147 = ssub.s32 %s31, %s38
      %p148 = scmp.eq.s32.totalorder %s147, 0
      %s150 = sadd.s32 %s149, 1
      %s151 = scalar_select %p148, %s149, %s150
      %p154 = pneg %p148
      %p155 = scmp.eq.s32.totalorder %s23, 1
      %p156 = por %p154, %p155
      %p157 = scmp.ne.s32.totalorder %s149, %s152
      %p158 = scmp.eq.s32.totalorder %s23, 0
      %p159 = por %p157, %p158
      %p160 = scmp.ne.s32.totalorder %s149, %s152
      %p161 = scmp.eq.s32.totalorder %s28, 1
      %p162 = por %p160, %p161
      %p163 = scmp.ne.s32.totalorder %s152, %s153
      %p164 = scmp.eq.s32.totalorder %s28, 0
      %p165 = por %p163, %p164
      %p166 = scmp.ne.s32.totalorder %s152, %s153
      %p167 = scmp.eq.s32.totalorder %s29, 1
      %p168 = por %p166, %p167
      %p170 = scmp.ne.s32.totalorder %s153, %s169
      %p171 = scmp.eq.s32.totalorder %s29, 0
      %p172 = por %p170, %p171
      %s174 = sadd.s32 %s173, 1
      %p177 = scmp.eq.s32.totalorder %s23, 1
      %p178 = scmp.ne.s32.totalorder %s173, %s175
      %p179 = scmp.eq.s32.totalorder %s23, 0
      %p180 = por %p178, %p179
      %p181 = scmp.ne.s32.totalorder %s173, %s175
      %p182 = scmp.eq.s32.totalorder %s28, 1
      %p183 = por %p181, %p182
      %p184 = scmp.ne.s32.totalorder %s175, %s176
      %p185 = scmp.eq.s32.totalorder %s28, 0
      %p186 = por %p184, %p185
      %p187 = scmp.ne.s32.totalorder %s175, %s176
      %p188 = scmp.eq.s32.totalorder %s29, 1
      %p189 = por %p187, %p188
      %p191 = scmp.ne.s32.totalorder %s176, %s190
      %p192 = scmp.eq.s32.totalorder %s29, 0
      %p193 = por %p191, %p192
      %s195 = sadd.s32 %s194, 1
      %p198 = scmp.eq.s32.totalorder %s23, 1
      %p199 = scmp.ne.s32.totalorder %s194, %s196
      %p200 = scmp.eq.s32.totalorder %s23, 0
      %p201 = por %p199, %p200
      %p202 = scmp.ne.s32.totalorder %s194, %s196
      %p203 = scmp.eq.s32.totalorder %s28, 1
      %p204 = por %p202, %p203
      %p205 = scmp.ne.s32.totalorder %s196, %s197
      %p206 = scmp.eq.s32.totalorder %s28, 0
      %p207 = por %p205, %p206
      %p208 = scmp.ne.s32.totalorder %s196, %s197
      %p209 = scmp.eq.s32.totalorder %s29, 1
      %p210 = por %p208, %p209
      %p212 = scmp.ne.s32.totalorder %s197, %s211
      %p213 = scmp.eq.s32.totalorder %s29, 0
      %p214 = por %p212, %p213
      %s215 = ssub.s32 %s30, %s42
      %p216 = scmp.eq.s32.totalorder %s215, 0
      %s218 = sadd.s32 %s217, 1
      %s219 = scalar_select %p216, %s217, %s218
      %p222 = pneg %p216
      %p223 = scmp.eq.s32.totalorder %s23, 1
      %p224 = por %p222, %p223
      %p225 = scmp.ne.s32.totalorder %s217, %s220
      %p226 = scmp.eq.s32.totalorder %s23, 0
      %p227 = por %p225, %p226
      %p228 = scmp.ne.s32.totalorder %s217, %s220
      %p229 = scmp.eq.s32.totalorder %s28, 1
      %p230 = por %p228, %p229
      %p231 = scmp.ne.s32.totalorder %s220, %s221
      %p232 = scmp.eq.s32.totalorder %s28, 0
      %p233 = por %p231, %p232
      %p234 = scmp.ne.s32.totalorder %s220, %s221
      %p235 = scmp.eq.s32.totalorder %s29, 1
      %p236 = por %p234, %p235
      %p238 = scmp.ne.s32.totalorder %s221, %s237
      %p239 = scmp.eq.s32.totalorder %s29, 0
      %p240 = por %p238, %p239
      %p241 = scmp.le.s32.totalorder 1, %s23
      %p242 = scmp.lt.s32.totalorder %s23, 3
      %p243 = pnand %p241, %p242
      %p244 = pneg %p243
      // Predicated region
      $region9: #{tpu_custom_call.1} parent=5 // pred_check
        _
      $region10: #{tpu_custom_call.1} parent=5 // pred_check_branch
        %246 = sbr.rel (%p243) target = $region12
      $region11: #{tpu_custom_call.1} parent=5 // pred_region
        %s247 = ssub.s32 %s23, 1
        // Predicated region
        $region13: #{tpu_custom_call.1} parent=11 // pred_check
          %p248 = pneg %p118
        $region14: #{tpu_custom_call.1} parent=11 // pred_check_branch
          %250 = sbr.rel (%p248) target = $region16
        $region15: #{tpu_custom_call.1} parent=11 // pred_region
          %s252 = ssub.s32 1280, 1280
          %253 = vsyncadd [#allocation8], %s252
          %s254 = sshll.u32 [#allocation9], 4
          %s255 = int_to_ptr.vmem [resolvable:$true] %s254
          %260 = dma.hbm_to_vmem [thread:$0]  %s2, 1280, %s255, [#allocation8], 64, 64, 4
        $region16: #{tpu_custom_call.1} parent=11 // pred_fallthru
          _
        // Predicated region
        $region17: #{tpu_custom_call.1} parent=11 // pred_check
          %p261 = pneg %p139
        $region18: #{tpu_custom_call.1} parent=11 // pred_check_branch
          %263 = sbr.rel (%p261) target = $region20
        $region19: #{tpu_custom_call.1} parent=11 // pred_region
          %s265 = ssub.s32 16, 16
          %266 = vsyncadd [#allocation11], %s265
          %s268 = sshll.u32 [#allocation10], 4
          %s269 = int_to_ptr.vmem [resolvable:$true] %s268
          %271 = dma.hbm_to_vmem [thread:$0]  %s3, 16, %s269, [#allocation11]
        $region20: #{tpu_custom_call.1} parent=11 // pred_fallthru
          _
        // Predicated region
        $region21: #{tpu_custom_call.1} parent=11 // pred_check
          %p272 = pneg %p186
        $region22: #{tpu_custom_call.1} parent=11 // pred_check_branch
          %274 = sbr.rel (%p272) target = $region24
        $region23: #{tpu_custom_call.1} parent=11 // pred_region
          %s276 = ssub.s32 16, 16
          %277 = vsyncadd [#allocation8], %s276
          %s279 = sshll.u32 [#allocation13], 4
          %s280 = int_to_ptr.vmem [resolvable:$true] %s279
          %282 = dma.hbm_to_vmem [thread:$0]  %s5, 16, %s280, [#allocation8]
        $region24: #{tpu_custom_call.1} parent=11 // pred_fallthru
          _
        // Predicated region
        $region25: #{tpu_custom_call.1} parent=11 // pred_check
          %p283 = pneg %p207
        $region26: #{tpu_custom_call.1} parent=11 // pred_check_branch
          %285 = sbr.rel (%p283) target = $region28
        $region27: #{tpu_custom_call.1} parent=11 // pred_region
          _
        $region28: #{tpu_custom_call.1} parent=11 // pred_fallthru
          _
      $region12: #{tpu_custom_call.1} parent=5 // pred_fallthru
        _
      %p286 = scmp.lt.s32.totalorder %s23, 2
      // Predicated region
      $region29: #{tpu_custom_call.1} parent=5 // pred_check
        %p287 = pneg %p286
      $region30: #{tpu_custom_call.1} parent=5 // pred_check_branch
        %289 = sbr.rel (%p287) target = $region32
      $region31: #{tpu_custom_call.1} parent=5 // pred_region
        // Predicated region
        $region33: #{tpu_custom_call.1} parent=31 // pred_check
          %p290 = pneg %p57
        $region34: #{tpu_custom_call.1} parent=31 // pred_check_branch
          %292 = sbr.rel (%p290) target = $region36
        $region35: #{tpu_custom_call.1} parent=31 // pred_region
          #allocation16 [shape = 'u32[6]{0}', space=smem, size = 0x18, scoped, tag = 'DMA stride descriptor']
          %s293 = sand.u32 %s23, 1
          %s294 = scalar_lea.sflag [#allocation5], %s293
          %s295 = sand.u32 %s47, 1
          %s296 = smul.addr %s295, 16
          %s297 = scalar_lea.vmem [#allocation4], %s296
          %s298 = smul.u32 2, %s30
          %s299 = smul.u32 2, %s31
          %s301 = ssub.s32 256, 256
          %302 = vsyncadd %s294, %s301
          %s303 = smul.addr %s298, 4
          %s304 = sadd.s32 %s299, %s303
          %s305 = smul.addr %s304, 64
          %s306 = scalar_lea.hbm %s0, %s305
          %s308 = sshll.u32 1, 14
          %s309 = sxor.u32 4294967295, %s308
          %s311 = sld [smem:[#allocation0]]
          %s312 = sadd.s32 2, %s311
          %s314 = sshll.u32 7, 26
          %s315 = sxor.u32 4294967295, %s314
          %s316 = sand.u32 0, %s315
          %s317 = sshll.u32 %s312, 26
          %s318 = sor.u32 %s316, %s317
          %s319 = sshll.u32 %s297, 4
          %s320 = int_to_ptr.vmem [resolvable:$true] %s319
          %326 = sst [smem:[#allocation16]] 256
          %s327 = scalar_lea.smem [#allocation16], 1
          %328 = sst [smem:[%s327]] 128
          %s329 = scalar_lea.smem [#allocation16], 2
          %330 = sst [smem:[%s329]] 2
          %s331 = scalar_lea.smem [#allocation16], 3
          %332 = sst [smem:[%s331]] 64
          %s333 = scalar_lea.smem [#allocation16], 4
          %334 = sst [smem:[%s333]] 64
          %s335 = scalar_lea.smem [#allocation16], 5
          %336 = sst [smem:[%s335]] 4
          %338 = dma.general %s306, 256, %s320, %s294, [#allocation15], [#allocation16], %s318, 0
        $region36: #{tpu_custom_call.1} parent=31 // pred_fallthru
          _
        // Predicated region
        $region37: #{tpu_custom_call.1} parent=31 // pred_check
          %p339 = pneg %p91
        $region38: #{tpu_custom_call.1} parent=31 // pred_check_branch
          %341 = sbr.rel (%p339) target = $region40
        $region39: #{tpu_custom_call.1} parent=31 // pred_region
          #allocation18 [shape = 'u32[6]{0}', space=smem, size = 0x18, scoped, tag = 'DMA stride descriptor']
          %s342 = sand.u32 %s23, 1
          %s343 = scalar_lea.sflag [#allocation8], %s342
          %s344 = sand.u32 %s81, 1
          %s345 = smul.addr %s344, 16
          %s346 = scalar_lea.vmem [#allocation7], %s345
          %s347 = sadd.s32 %s31, 1
          %p348 = scmp.lt.s32.totalorder %s347, 1
          %s349 = scalar_select %p348, %s347, 1
          %s350 = smul.u32 2, %s30
          %s351 = smul.u32 2, %s349
          %s353 = ssub.s32 256, 256
          %354 = vsyncadd %s343, %s353
          %s355 = smul.addr %s350, 4
          %s356 = sadd.s32 %s351, %s355
          %s357 = smul.addr %s356, 64
          %s358 = scalar_lea.hbm %s1, %s357
          %s360 = sshll.u32 1, 14
          %s361 = sxor.u32 4294967295, %s360
          %s363 = sld [smem:[#allocation0]]
          %s364 = sadd.s32 2, %s363
          %s366 = sshll.u32 7, 26
          %s367 = sxor.u32 4294967295, %s366
          %s368 = sand.u32 0, %s367
          %s369 = sshll.u32 %s364, 26
          %s370 = sor.u32 %s368, %s369
          %s371 = sshll.u32 %s346, 4
          %s372 = int_to_ptr.vmem [resolvable:$true] %s371
          %378 = sst [smem:[#allocation18]] 256
          %s379 = scalar_lea.smem [#allocation18], 1
          %380 = sst [smem:[%s379]] 128
          %s381 = scalar_lea.smem [#allocation18], 2
          %382 = sst [smem:[%s381]] 2
          %s383 = scalar_lea.smem [#allocation18], 3
          %384 = sst [smem:[%s383]] 64
          %s385 = scalar_lea.smem [#allocation18], 4
          %386 = sst [smem:[%s385]] 64
          %s387 = scalar_lea.smem [#allocation18], 5
          %388 = sst [smem:[%s387]] 4
          %390 = dma.general %s358, 256, %s372, %s343, [#allocation17], [#allocation18], %s370, 0
        $region40: #{tpu_custom_call.1} parent=31 // pred_fallthru
          _
        // Predicated region
        $region41: #{tpu_custom_call.1} parent=31 // pred_check
          %p391 = pneg %p159
        $region42: #{tpu_custom_call.1} parent=31 // pred_check_branch
          %393 = sbr.rel (%p391) target = $region44
        $region43: #{tpu_custom_call.1} parent=31 // pred_region
          %s394 = sand.u32 %s23, 1
          %s395 = scalar_lea.sflag [#allocation5], %s394
          %s396 = sand.u32 %s149, 1
          %s397 = smul.addr %s396, 16
          %s398 = scalar_lea.vmem [#allocation12], %s397
          %s399 = smul.u32 2, %s31
          %s401 = ssub.s32 256, 256
          %402 = vsyncadd %s395, %s401
          %s403 = smul.addr %s399, 128
          %s404 = scalar_lea.hbm %s4, %s403
          %s405 = sshll.u32 %s398, 4
          %s406 = int_to_ptr.vmem [resolvable:$true] %s405
          %411 = dma.hbm_to_vmem [thread:$0]  %s404, 256, %s406, %s395, 128, 128, 8
        $region44: #{tpu_custom_call.1} parent=31 // pred_fallthru
          _
      $region32: #{tpu_custom_call.1} parent=5 // pred_fallthru
        _
      %p412 = scmp.le.s32.totalorder 1, %s23
      %p413 = scmp.lt.s32.totalorder %s23, 3
      %p414 = pnand %p412, %p413
      %p415 = pneg %p414
      // Predicated region
      $region45: #{tpu_custom_call.1} parent=5 // pred_check
        _
      $region46: #{tpu_custom_call.1} parent=5 // pred_check_branch
        %417 = sbr.rel (%p414) target = $region48
      $region47: #{tpu_custom_call.1} parent=5 // pred_region
        %s418 = ssub.s32 %s23, 1
        %s419 = sand.u32 %s28, 1
        %s420 = scalar_lea.sflag [#allocation5], %s419
        %s421 = sand.u32 %s50, 1
        %s422 = smul.addr %s421, 16
        %s423 = scalar_lea.vmem [#allocation4], %s422
        // Predicated region
        $region49: #{tpu_custom_call.1} parent=47 // pred_check
          %p424 = pneg %p63
        $region50: #{tpu_custom_call.1} parent=47 // pred_check_branch
          %426 = sbr.rel (%p424) target = $region52
        $region51: #{tpu_custom_call.1} parent=47 // pred_region
          %427 = dma.done %s420, 256
        $region52: #{tpu_custom_call.1} parent=47 // pred_fallthru
          _
        %s428 = sand.u32 %s28, 1
        %s429 = scalar_lea.sflag [#allocation8], %s428
        %s430 = sand.u32 %s84, 1
        %s431 = smul.addr %s430, 16
        %s432 = scalar_lea.vmem [#allocation7], %s431
        // Predicated region
        $region53: #{tpu_custom_call.1} parent=47 // pred_check
          %p433 = pneg %p97
        $region54: #{tpu_custom_call.1} parent=47 // pred_check_branch
          %435 = sbr.rel (%p433) target = $region56
        $region55: #{tpu_custom_call.1} parent=47 // pred_region
          %436 = dma.done %s429, 256
        $region56: #{tpu_custom_call.1} parent=47 // pred_fallthru
          _
        // Predicated region
        $region57: #{tpu_custom_call.1} parent=47 // pred_check
          %p437 = pneg %p118
        $region58: #{tpu_custom_call.1} parent=47 // pred_check_branch
          %439 = sbr.rel (%p437) target = $region60
        $region59: #{tpu_custom_call.1} parent=47 // pred_region
          %440 = dma.done [#allocation8], 1280
        $region60: #{tpu_custom_call.1} parent=47 // pred_fallthru
          _
        // Predicated region
        $region61: #{tpu_custom_call.1} parent=47 // pred_check
          %p441 = pneg %p139
        $region62: #{tpu_custom_call.1} parent=47 // pred_check_branch
          %443 = sbr.rel (%p441) target = $region64
        $region63: #{tpu_custom_call.1} parent=47 // pred_region
          %444 = dma.done [#allocation11], 16
        $region64: #{tpu_custom_call.1} parent=47 // pred_fallthru
          _
        %s445 = sand.u32 %s28, 1
        %s446 = scalar_lea.sflag [#allocation5], %s445
        %s447 = sand.u32 %s152, 1
        %s448 = smul.addr %s447, 16
        %s449 = scalar_lea.vmem [#allocation12], %s448
        // Predicated region
        $region65: #{tpu_custom_call.1} parent=47 // pred_check
          %p450 = pneg %p165
        $region66: #{tpu_custom_call.1} parent=47 // pred_check_branch
          %452 = sbr.rel (%p450) target = $region68
        $region67: #{tpu_custom_call.1} parent=47 // pred_region
          %453 = dma.done %s446, 256
        $region68: #{tpu_custom_call.1} parent=47 // pred_fallthru
          _
        // Predicated region
        $region69: #{tpu_custom_call.1} parent=47 // pred_check
          %p454 = pneg %p186
        $region70: #{tpu_custom_call.1} parent=47 // pred_check_branch
          %456 = sbr.rel (%p454) target = $region72
        $region71: #{tpu_custom_call.1} parent=47 // pred_region
          %457 = dma.done [#allocation8], 16
        $region72: #{tpu_custom_call.1} parent=47 // pred_fallthru
          _
        %s458 = sand.u32 %s28, 1
        %s459 = scalar_lea.sflag [#allocation5], %s458
        %s460 = sand.u32 %s50, 1
        %s461 = smul.addr %s460, 16
        %s462 = scalar_lea.vmem [#allocation4], %s461
        %p463 = pneg %p63
        %p464 = pneg %p60
        %s465 = sand.u32 %s28, 1
        %s466 = scalar_lea.sflag [#allocation8], %s465
        %s467 = sand.u32 %s84, 1
        %s468 = smul.addr %s467, 16
        %s469 = scalar_lea.vmem [#allocation7], %s468
        %p470 = pneg %p97
        %p471 = pneg %p94
        %p472 = pneg %p118
        %p473 = pneg %p115
        %p474 = pneg %p139
        %p475 = pneg %p136
        %s476 = sand.u32 %s28, 1
        %s477 = scalar_lea.sflag [#allocation5], %s476
        %s478 = sand.u32 %s152, 1
        %s479 = smul.addr %s478, 16
        %s480 = scalar_lea.vmem [#allocation12], %s479
        %p481 = pneg %p165
        %p482 = pneg %p162
        %p483 = pneg %p186
        %p484 = pneg %p183
        %p485 = pneg %p207
        %p486 = pneg %p204
        %p487 = pneg %p233
        %p488 = pneg %p230
        %s489 = smul.u32 2, %s32
        %s490 = smul.u32 2, %s33
        %s491 = sadd.s32 %s33, 1
        %p492 = scmp.lt.s32.totalorder %s491, 1
        %s493 = scalar_select %p492, %s491, 1
        %s494 = smul.u32 2, %s32
        %s495 = smul.u32 2, %s493
        %s496 = smul.u32 2, %s33
        %p498 = scmp.eq.s32.totalorder %s33, 0
        // Predicated region
        $region73: #{tpu_custom_call.1} parent=47 // pred_check
          %p499 = pneg %p498
        $region74: #{tpu_custom_call.1} parent=47 // pred_check_branch
          %501 = sbr.rel (%p499) target = $region76
        $region75: #{tpu_custom_call.1} parent=47 // pred_region
          %502 = vst [vmem:[#allocation2] sm:$0x3] -1e+30
        $region76: #{tpu_custom_call.1} parent=47 // pred_fallthru
          _
        %v503 = vld [vmem:[%s423] sm:$0xf]
        %v504 = vld [vmem:[%s423 + $0x4] sm:$0xf]
        %v505 = vld [vmem:[%s423 + $0x8] sm:$0xf]
        %v506 = vld [vmem:[%s423 + $0xc] sm:$0xf]
        %v507 = vld [vmem:[%s432] sm:$0xf]
        %v508 = vld [vmem:[%s432 + $0x4] sm:$0xf]
        %v509 = vld [vmem:[%s432 + $0x8] sm:$0xf]
        %v510 = vld [vmem:[%s432 + $0xc] sm:$0xf]
        %v515 = vunpack.c.l.b16 %v503
        %v516 = vunpack.c.l.b16 %v504
        %v517 = vunpack.c.l.b16 %v505
        %v518 = vunpack.c.l.b16 %v506
        %v519 = vpack.c.b16 %v516, %v515
        %v520 = vpack.c.b16 %v518, %v517
        %v525 = vunpack.c.l.b16 %v507
        %v526 = vunpack.c.l.b16 %v508
        %v527 = vunpack.c.l.b16 %v509
        %v528 = vunpack.c.l.b16 %v510
        %v529 = vpack.c.b16 %v526, %v525
        %v530 = vpack.c.b16 %v528, %v527
        %v531 = vld [vmem:[#allocation9] sm:$0xf]
        %v532 = vld [vmem:[#allocation9 + $0x4] sm:$0xf]
        %v533 = vld [vmem:[#allocation9 + $0x8] sm:$0xf]
        %v534 = vld [vmem:[#allocation9 + $0xc] sm:$0xf]
        %v535 = vld [vmem:[#allocation9 + $0x10] sm:$0xf]
        %v536 = vld [vmem:[#allocation9 + $0x14] sm:$0xf]
        %v537 = vld [vmem:[#allocation9 + $0x18] sm:$0xf]
        %v538 = vld [vmem:[#allocation9 + $0x1c] sm:$0xf]
        %v543 = vunpack.c.l.b16 %v535
        %v544 = vunpack.c.l.b16 %v536
        %v545 = vunpack.c.l.b16 %v537
        %v546 = vunpack.c.l.b16 %v538
        %v547 = vpack.c.b16 %v544, %v543
        %v548 = vpack.c.b16 %v546, %v545
        %vm551 = vcmask 261120
        %v553 = vsel %vm551, %v519, 0
        %v556 = vsel %vm551, %v529, 0
        %v559 = vsel %vm551, %v520, 0
        %v562 = vsel %vm551, %v530, 0
        %564 = vmatprep.subr.bf16.mxu0 0
        %565 = vmatpush1.bf16.msra.mxu0 %v547
        %566 = vmatprep.subr.bf16.mxu0 0
        %567 = vmatpush1.bf16.msra.mxu0 %v548
        %568 = vmatprep.subr.bf16.mxu0 0
        %569 = vmatpush1.bf16.msra.mxu0 0
        %570 = vmatprep.subr.bf16.mxu0 0
        %571 = vmatpush1.bf16.msra.mxu0 0
        %572 = vmatprep.subr.bf16.mxu0 0
        %573 = vmatpush1.bf16.msra.mxu0 0
        %574 = vmatprep.subr.bf16.mxu0 0
        %575 = vmatpush1.bf16.msra.mxu0 0
        %576 = vmatprep.subr.bf16.mxu0 0
        %577 = vmatpush1.bf16.msra.mxu0 0
        %578 = vmatprep.subr.bf16.mxu0 0
        %579 = vmatpush1.bf16.msra.mxu0 0
        %580 = vmatprep.subr.bf16.mxu0 0
        %581 = vmatpush1.bf16.msra.mxu0 0
        %582 = vmatprep.subr.bf16.mxu0 0
        %583 = vmatpush1.bf16.msra.mxu0 0
        %584 = vmatprep.subr.bf16.mxu0 0
        %585 = vmatpush1.bf16.msra.mxu0 0
        %586 = vmatprep.subr.bf16.mxu0 0
        %587 = vmatpush1.bf16.msra.mxu0 0
        %588 = vmatprep.subr.bf16.mxu0 0
        %589 = vmatpush1.bf16.msra.mxu0 0
        %590 = vmatprep.subr.bf16.mxu0 0
        %591 = vmatpush1.bf16.msra.mxu0 0
        %592 = vmatprep.subr.bf16.mxu0 0
        %593 = vmatpush1.bf16.msra.mxu0 0
        %594 = vmatprep.subr.bf16.mxu0 0
        %595 = vmatpush1.bf16.msra.mxu0 0
        %596 = vmatprep.mubr.bf16.mxu0 0
        %597 = vmatmul.mubr.bf16.gmra.mrb[0].mxu0 %v553
        %v598 = vpop.f32.mrb[0].mxu0
        %v599 = vadd.f32 0.0, %v598
        %v600 = vpop.f32.mrb[0].mxu0
        %v601 = vpop.f32.mrb[0].mxu0
        %v602 = vadd.f32 0.0, %v601
        %v603 = vpop.f32.mrb[0].mxu0
        %604 = vmatprep.mubr.bf16.mxu0 0
        %605 = vmatmul.mubr.bf16.gmra.mrb[0].mxu0 %v556
        %v606 = vpop.f32.mrb[0].mxu0
        %v607 = vadd.f32 0.0, %v606
        %v608 = vpop.f32.mrb[0].mxu0
        %v609 = vpop.f32.mrb[0].mxu0
        %v610 = vpop.f32.mrb[0].mxu0
        %611 = vmatprep.mubr.bf16.mxu0 0
        %612 = vmatmul.mubr.bf16.gmra.mrb[0].mxu0 %v559
        %v613 = vpop.f32.mrb[0].mxu0
        %v614 = vadd.f32 0.0, %v613
        %v615 = vpop.f32.mrb[0].mxu0
        %v616 = vpop.f32.mrb[0].mxu0
        %v617 = vadd.f32 0.0, %v616
        %v618 = vpop.f32.mrb[0].mxu0
        %619 = vmatprep.mubr.bf16.mxu0 0
        %620 = vmatmul.mubr.bf16.gmra.mrb[0].mxu0 %v562
        %v621 = vpop.f32.mrb[0].mxu0
        %v622 = vadd.f32 0.0, %v621
        %v623 = vpop.f32.mrb[0].mxu0
        %v624 = vpop.f32.mrb[0].mxu0
        %v625 = vpop.f32.mrb[0].mxu0
        %626 = vdwg.mxu0
        %v627 = vrot.slane %v599, 1
        %v628 = vrot.slane %v602, 1
        %v629 = vrot.slane %v607, 1
        %v630 = vrot.slane %v614, 1
        %v631 = vrot.slane %v617, 1
        %v632 = vrot.slane %v622, 1
        %v633 = vlaneseq
        %v634 = vshrl.u32 %v633, 7
        %vm635 = vcmp.lt.s32.totalorder %v634, 7
        %v636 = vsel %vm635, %v631, %v632
        %v637 = vsel %vm635, %v630, %v631
        %v638 = vsel %vm635, %v628, %v629
        %v639 = vsel %vm635, %v627, %v628
        %v644 = vunpack.c.l.b16 %v531
        %v645 = vunpack.c.l.b16 %v532
        %v646 = vunpack.c.l.b16 %v533
        %v647 = vunpack.c.l.b16 %v534
        %v648 = vpack.c.b16 %v645, %v644
        %v649 = vpack.c.b16 %v647, %v646
        %652 = vmatprep.subr.bf16.mxu0 0
        %653 = vmatpush1.bf16.msra.mxu0 %v648
        %654 = vmatprep.subr.bf16.mxu0 0
        %655 = vmatpush1.bf16.msra.mxu0 %v649
        %656 = vmatprep.subr.bf16.mxu0 0
        %657 = vmatpush1.bf16.msra.mxu0 0
        %658 = vmatprep.subr.bf16.mxu0 0
        %659 = vmatpush1.bf16.msra.mxu0 0
        %660 = vmatprep.subr.bf16.mxu0 0
        %661 = vmatpush1.bf16.msra.mxu0 0
        %662 = vmatprep.subr.bf16.mxu0 0
        %663 = vmatpush1.bf16.msra.mxu0 0
        %664 = vmatprep.subr.bf16.mxu0 0
        %665 = vmatpush1.bf16.msra.mxu0 0
        %666 = vmatprep.subr.bf16.mxu0 0
        %667 = vmatpush1.bf16.msra.mxu0 0
        %668 = vmatprep.subr.bf16.mxu0 0
        %669 = vmatpush1.bf16.msra.mxu0 0
        %670 = vmatprep.subr.bf16.mxu0 0
        %671 = vmatpush1.bf16.msra.mxu0 0
        %672 = vmatprep.subr.bf16.mxu0 0
        %673 = vmatpush1.bf16.msra.mxu0 0
        %674 = vmatprep.subr.bf16.mxu0 0
        %675 = vmatpush1.bf16.msra.mxu0 0
        %676 = vmatprep.subr.bf16.mxu0 0
        %677 = vmatpush1.bf16.msra.mxu0 0
        %678 = vmatprep.subr.bf16.mxu0 0
        %679 = vmatpush1.bf16.msra.mxu0 0
        %680 = vmatprep.subr.bf16.mxu0 0
        %681 = vmatpush1.bf16.msra.mxu0 0
        %682 = vmatprep.subr.bf16.mxu0 0
        %683 = vmatpush1.bf16.msra.mxu0 0
        %684 = vmatprep.mubr.bf16.mxu0 0
        %685 = vmatmul.mubr.bf16.gmra.mrb[0].mxu0 %v553
        %v686 = vpop.f32.mrb[0].mxu0
        %v687 = vadd.f32 %v639, %v686
        %v688 = vpop.f32.mrb[0].mxu0
        %v689 = vpop.f32.mrb[0].mxu0
        %v690 = vadd.f32 %v638, %v689
        %v691 = vpop.f32.mrb[0].mxu0
        %692 = vmatprep.mubr.bf16.mxu0 0
        %693 = vmatmul.mubr.bf16.gmra.mrb[0].mxu0 %v556
        %v694 = vpop.f32.mrb[0].mxu0
        %v695 = vpop.f32.mrb[0].mxu0
        %v696 = vpop.f32.mrb[0].mxu0
        %v697 = vpop.f32.mrb[0].mxu0
        %698 = vmatprep.mubr.bf16.mxu0 0
        %699 = vmatmul.mubr.bf16.gmra.mrb[0].mxu0 %v559
        %v700 = vpop.f32.mrb[0].mxu0
        %v701 = vadd.f32 %v637, %v700
        %v702 = vpop.f32.mrb[0].mxu0
        %v703 = vpop.f32.mrb[0].mxu0
        %v704 = vadd.f32 %v636, %v703
        %v705 = vpop.f32.mrb[0].mxu0
        %706 = vmatprep.mubr.bf16.mxu0 0
        %707 = vmatmul.mubr.bf16.gmra.mrb[0].mxu0 %v562
        %v708 = vpop.f32.mrb[0].mxu0
        %v709 = vpop.f32.mrb[0].mxu0
        %v710 = vpop.f32.mrb[0].mxu0
        %v711 = vpop.f32.mrb[0].mxu0
        %712 = vdwg.mxu0
        %v713 = vld [vmem:[#allocation9 + $0x20] sm:$0xf]
        %v714 = vld [vmem:[#allocation9 + $0x24] sm:$0xf]
        %v715 = vld [vmem:[#allocation9 + $0x28] sm:$0xf]
        %v716 = vld [vmem:[#allocation9 + $0x2c] sm:$0xf]
        %v721 = vunpack.c.l.b16 %v713
        %v722 = vunpack.c.l.b16 %v714
        %v723 = vunpack.c.l.b16 %v715
        %v724 = vunpack.c.l.b16 %v716
        %v725 = vpack.c.b16 %v722, %v721
        %v726 = vpack.c.b16 %v724, %v723
        %729 = vmatprep.subr.bf16.mxu0 0
        %730 = vmatpush1.bf16.msra.mxu0 %v725
        %731 = vmatprep.subr.bf16.mxu0 0
        %732 = vmatpush1.bf16.msra.mxu0 %v726
        %733 = vmatprep.subr.bf16.mxu0 0
        %734 = vmatpush1.bf16.msra.mxu0 0
        %735 = vmatprep.subr.bf16.mxu0 0
        %736 = vmatpush1.bf16.msra.mxu0 0
        %737 = vmatprep.subr.bf16.mxu0 0
        %738 = vmatpush1.bf16.msra.mxu0 0
        %739 = vmatprep.subr.bf16.mxu0 0
        %740 = vmatpush1.bf16.msra.mxu0 0
        %741 = vmatprep.subr.bf16.mxu0 0
        %742 = vmatpush1.bf16.msra.mxu0 0
        %743 = vmatprep.subr.bf16.mxu0 0
        %744 = vmatpush1.bf16.msra.mxu0 0
        %745 = vmatprep.subr.bf16.mxu0 0
        %746 = vmatpush1.bf16.msra.mxu0 0
        %747 = vmatprep.subr.bf16.mxu0 0
        %748 = vmatpush1.bf16.msra.mxu0 0
        %749 = vmatprep.subr.bf16.mxu0 0
        %750 = vmatpush1.bf16.msra.mxu0 0
        %751 = vmatprep.subr.bf16.mxu0 0
        %752 = vmatpush1.bf16.msra.mxu0 0
        %753 = vmatprep.subr.bf16.mxu0 0
        %754 = vmatpush1.bf16.msra.mxu0 0
        %755 = vmatprep.subr.bf16.mxu0 0
        %756 = vmatpush1.bf16.msra.mxu0 0
        %757 = vmatprep.subr.bf16.mxu0 0
        %758 = vmatpush1.bf16.msra.mxu0 0
        %759 = vmatprep.subr.bf16.mxu0 0
        %760 = vmatpush1.bf16.msra.mxu0 0
        %761 = vmatprep.mubr.bf16.mxu0 0
        %762 = vmatmul.mubr.bf16.gmra.mrb[0].mxu0 %v553
        %v763 = vpop.f32.mrb[0].mxu0
        %v764 = vadd.f32 0.0, %v763
        %v765 = vpop.f32.mrb[0].mxu0
        %v766 = vpop.f32.mrb[0].mxu0
        %v767 = vadd.f32 0.0, %v766
        %v768 = vpop.f32.mrb[0].mxu0
        %769 = vmatprep.mubr.bf16.mxu0 0
        %770 = vmatmul.mubr.bf16.gmra.mrb[0].mxu0 %v556
        %v771 = vpop.f32.mrb[0].mxu0
        %v772 = vadd.f32 0.0, %v771
        %v773 = vpop.f32.mrb[0].mxu0
        %v774 = vpop.f32.mrb[0].mxu0
        %v775 = vpop.f32.mrb[0].mxu0
        %776 = vmatprep.mubr.bf16.mxu0 0
        %777 = vmatmul.mubr.bf16.gmra.mrb[0].mxu0 %v559
        %v778 = vpop.f32.mrb[0].mxu0
        %v779 = vadd.f32 0.0, %v778
        %v780 = vpop.f32.mrb[0].mxu0
        %v781 = vpop.f32.mrb[0].mxu0
        %v782 = vadd.f32 0.0, %v781
        %v783 = vpop.f32.mrb[0].mxu0
        %784 = vmatprep.mubr.bf16.mxu0 0
        %785 = vmatmul.mubr.bf16.gmra.mrb[0].mxu0 %v562
        %v786 = vpop.f32.mrb[0].mxu0
        %v787 = vadd.f32 0.0, %v786
        %v788 = vpop.f32.mrb[0].mxu0
        %v789 = vpop.f32.mrb[0].mxu0
        %v790 = vpop.f32.mrb[0].mxu0
        %791 = vdwg.mxu0
        %v792 = vrot.slane %v764, 2
        %v793 = vrot.slane %v767, 2
        %v794 = vrot.slane %v772, 2
        %v795 = vrot.slane %v779, 2
        %v796 = vrot.slane %v782, 2
        %v797 = vrot.slane %v787, 2
        %vm798 = vcmp.lt.s32.totalorder %v634, 6
        %v799 = vsel %vm798, %v796, %v797
        %v800 = vsel %vm798, %v795, %v796
        %v801 = vsel %vm798, %v793, %v794
        %v802 = vsel %vm798, %v792, %v793
        %v803 = vadd.f32 %v687, %v802
        %v804 = vadd.f32 %v690, %v801
        %v805 = vadd.f32 %v701, %v800
        %v806 = vadd.f32 %v704, %v799
        %v807 = vld [vmem:[#allocation9 + $0x30] sm:$0xf]
        %v808 = vld [vmem:[#allocation9 + $0x34] sm:$0xf]
        %v809 = vld [vmem:[#allocation9 + $0x38] sm:$0xf]
        %v810 = vld [vmem:[#allocation9 + $0x3c] sm:$0xf]
        %v815 = vunpack.c.l.b16 %v807
        %v816 = vunpack.c.l.b16 %v808
        %v817 = vunpack.c.l.b16 %v809
        %v818 = vunpack.c.l.b16 %v810
        %v819 = vpack.c.b16 %v816, %v815
        %v820 = vpack.c.b16 %v818, %v817
        %823 = vmatprep.subr.bf16.mxu0 0
        %824 = vmatpush1.bf16.msra.mxu0 %v819
        %825 = vmatprep.subr.bf16.mxu0 0
        %826 = vmatpush1.bf16.msra.mxu0 %v820
        %827 = vmatprep.subr.bf16.mxu0 0
        %828 = vmatpush1.bf16.msra.mxu0 0
        %829 = vmatprep.subr.bf16.mxu0 0
        %830 = vmatpush1.bf16.msra.mxu0 0
        %831 = vmatprep.subr.bf16.mxu0 0
        %832 = vmatpush1.bf16.msra.mxu0 0
        %833 = vmatprep.subr.bf16.mxu0 0
        %834 = vmatpush1.bf16.msra.mxu0 0
        %835 = vmatprep.subr.bf16.mxu0 0
        %836 = vmatpush1.bf16.msra.mxu0 0
        %837 = vmatprep.subr.bf16.mxu0 0
        %838 = vmatpush1.bf16.msra.mxu0 0
        %839 = vmatprep.subr.bf16.mxu0 0
        %840 = vmatpush1.bf16.msra.mxu0 0
        %841 = vmatprep.subr.bf16.mxu0 0
        %842 = vmatpush1.bf16.msra.mxu0 0
        %843 = vmatprep.subr.bf16.mxu0 0
        %844 = vmatpush1.bf16.msra.mxu0 0
        %845 = vmatprep.subr.bf16.mxu0 0
        %846 = vmatpush1.bf16.msra.mxu0 0
        %847 = vmatprep.subr.bf16.mxu0 0
        %848 = vmatpush1.bf16.msra.mxu0 0
        %849 = vmatprep.subr.bf16.mxu0 0
        %850 = vmatpush1.bf16.msra.mxu0 0
        %851 = vmatprep.subr.bf16.mxu0 0
        %852 = vmatpush1.bf16.msra.mxu0 0
        %853 = vmatprep.subr.bf16.mxu0 0
        %854 = vmatpush1.bf16.msra.mxu0 0
        %855 = vmatprep.mubr.bf16.mxu0 0
        %856 = vmatmul.mubr.bf16.gmra.mrb[0].mxu0 %v553
        %v857 = vpop.f32.mrb[0].mxu0
        %v858 = vadd.f32 0.0, %v857
        %v859 = vpop.f32.mrb[0].mxu0
        %v860 = vpop.f32.mrb[0].mxu0
        %v861 = vadd.f32 0.0, %v860
        %v862 = vpop.f32.mrb[0].mxu0
        %863 = vmatprep.mubr.bf16.mxu0 0
        %864 = vmatmul.mubr.bf16.gmra.mrb[0].mxu0 %v556
        %v865 = vpop.f32.mrb[0].mxu0
        %v866 = vadd.f32 0.0, %v865
        %v867 = vpop.f32.mrb[0].mxu0
        %v868 = vpop.f32.mrb[0].mxu0
        %v869 = vpop.f32.mrb[0].mxu0
        %870 = vmatprep.mubr.bf16.mxu0 0
        %871 = vmatmul.mubr.bf16.gmra.mrb[0].mxu0 %v559
        %v872 = vpop.f32.mrb[0].mxu0
        %v873 = vadd.f32 0.0, %v872
        %v874 = vpop.f32.mrb[0].mxu0
        %v875 = vpop.f32.mrb[0].mxu0
        %v876 = vadd.f32 0.0, %v875
        %v877 = vpop.f32.mrb[0].mxu0
        %878 = vmatprep.mubr.bf16.mxu0 0
        %879 = vmatmul.mubr.bf16.gmra.mrb[0].mxu0 %v562
        %v880 = vpop.f32.mrb[0].mxu0
        %v881 = vadd.f32 0.0, %v880
        %v882 = vpop.f32.mrb[0].mxu0
        %v883 = vpop.f32.mrb[0].mxu0
        %v884 = vpop.f32.mrb[0].mxu0
        %885 = vdwg.mxu0
        %v886 = vrot.slane %v858, 3
        %v887 = vrot.slane %v861, 3
        %v888 = vrot.slane %v866, 3
        %v889 = vrot.slane %v873, 3
        %v890 = vrot.slane %v876, 3
        %v891 = vrot.slane %v881, 3
        %vm892 = vcmp.lt.s32.totalorder %v634, 5
        %v893 = vsel %vm892, %v890, %v891
        %v894 = vsel %vm892, %v889, %v890
        %v895 = vsel %vm892, %v887, %v888
        %v896 = vsel %vm892, %v886, %v887
        %v897 = vadd.f32 %v803, %v896
        %v898 = vadd.f32 %v804, %v895
        %v899 = vadd.f32 %v805, %v894
        %v900 = vadd.f32 %v806, %v893
        %v901 = vld [vmem:[#allocation9 + $0x40] sm:$0xf]
        %v902 = vld [vmem:[#allocation9 + $0x44] sm:$0xf]
        %v903 = vld [vmem:[#allocation9 + $0x48] sm:$0xf]
        %v904 = vld [vmem:[#allocation9 + $0x4c] sm:$0xf]
        %v909 = vunpack.c.l.b16 %v901
        %v910 = vunpack.c.l.b16 %v902
        %v911 = vunpack.c.l.b16 %v903
        %v912 = vunpack.c.l.b16 %v904
        %v913 = vpack.c.b16 %v910, %v909
        %v914 = vpack.c.b16 %v912, %v911
        %917 = vmatprep.subr.bf16.mxu0 0
        %918 = vmatpush1.bf16.msra.mxu0 %v913
        %919 = vmatprep.subr.bf16.mxu0 0
        %920 = vmatpush1.bf16.msra.mxu0 %v914
        %921 = vmatprep.subr.bf16.mxu0 0
        %922 = vmatpush1.bf16.msra.mxu0 0
        %923 = vmatprep.subr.bf16.mxu0 0
        %924 = vmatpush1.bf16.msra.mxu0 0
        %925 = vmatprep.subr.bf16.mxu0 0
        %926 = vmatpush1.bf16.msra.mxu0 0
        %927 = vmatprep.subr.bf16.mxu0 0
        %928 = vmatpush1.bf16.msra.mxu0 0
        %929 = vmatprep.subr.bf16.mxu0 0
        %930 = vmatpush1.bf16.msra.mxu0 0
        %931 = vmatprep.subr.bf16.mxu0 0
        %932 = vmatpush1.bf16.msra.mxu0 0
        %933 = vmatprep.subr.bf16.mxu0 0
        %934 = vmatpush1.bf16.msra.mxu0 0
        %935 = vmatprep.subr.bf16.mxu0 0
        %936 = vmatpush1.bf16.msra.mxu0 0
        %937 = vmatprep.subr.bf16.mxu0 0
        %938 = vmatpush1.bf16.msra.mxu0 0
        %939 = vmatprep.subr.bf16.mxu0 0
        %940 = vmatpush1.bf16.msra.mxu0 0
        %941 = vmatprep.subr.bf16.mxu0 0
        %942 = vmatpush1.bf16.msra.mxu0 0
        %943 = vmatprep.subr.bf16.mxu0 0
        %944 = vmatpush1.bf16.msra.mxu0 0
        %945 = vmatprep.subr.bf16.mxu0 0
        %946 = vmatpush1.bf16.msra.mxu0 0
        %947 = vmatprep.subr.bf16.mxu0 0
        %948 = vmatpush1.bf16.msra.mxu0 0
        %949 = vmatprep.mubr.bf16.mxu0 0
        %950 = vmatmul.mubr.bf16.gmra.mrb[0].mxu0 %v553
        %v951 = vpop.f32.mrb[0].mxu0
        %v952 = vadd.f32 0.0, %v951
        %v953 = vpop.f32.mrb[0].mxu0
        %v954 = vpop.f32.mrb[0].mxu0
        %v955 = vadd.f32 0.0, %v954
        %v956 = vpop.f32.mrb[0].mxu0
        %957 = vmatprep.mubr.bf16.mxu0 0
        %958 = vmatmul.mubr.bf16.gmra.mrb[0].mxu0 %v556
        %v959 = vpop.f32.mrb[0].mxu0
        %v960 = vadd.f32 0.0, %v959
        %v961 = vpop.f32.mrb[0].mxu0
        %v962 = vpop.f32.mrb[0].mxu0
        %v963 = vpop.f32.mrb[0].mxu0
        %964 = vmatprep.mubr.bf16.mxu0 0
        %965 = vmatmul.mubr.bf16.gmra.mrb[0].mxu0 %v559
        %v966 = vpop.f32.mrb[0].mxu0
        %v967 = vadd.f32 0.0, %v966
        %v968 = vpop.f32.mrb[0].mxu0
        %v969 = vpop.f32.mrb[0].mxu0
        %v970 = vadd.f32 0.0, %v969
        %v971 = vpop.f32.mrb[0].mxu0
        %972 = vmatprep.mubr.bf16.mxu0 0
        %973 = vmatmul.mubr.bf16.gmra.mrb[0].mxu0 %v562
        %v974 = vpop.f32.mrb[0].mxu0
        %v975 = vadd.f32 0.0, %v974
        %v976 = vpop.f32.mrb[0].mxu0
        %v977 = vpop.f32.mrb[0].mxu0
        %v978 = vpop.f32.mrb[0].mxu0
        %979 = vdwg.mxu0
        %v980 = vrot.slane %v952, 4
        %v981 = vrot.slane %v955, 4
        %v982 = vrot.slane %v960, 4
        %v983 = vrot.slane %v967, 4
        %v984 = vrot.slane %v970, 4
        %v985 = vrot.slane %v975, 4
        %vm986 = vcmp.lt.s32.totalorder %v634, 4
        %v987 = vsel %vm986, %v984, %v985
        %v988 = vsel %vm986, %v983, %v984
        %v989 = vsel %vm986, %v981, %v982
        %v990 = vsel %vm986, %v980, %v981
        %v991 = vadd.f32 %v897, %v990
        %v992 = vadd.f32 %v898, %v989
        %v993 = vadd.f32 %v899, %v988
        %v994 = vadd.f32 %v900, %v987
        %v995 = vld [vmem:[#allocation10] sm:$0x1]
        %v997 = vlaneseq
        %v998 = vshrl.u32 %v997, 7
        %v999 = vsub.s32 0, %v998
        %v1000 = vrot.slane %v995, %v999
        %v1002 = vadd.f32 %v991, %v1000
        %v1003 = vadd.f32 %v992, %v1000
        %v1004 = vadd.f32 %v993, %v1000
        %v1005 = vadd.f32 %v994, %v1000
        %vm1006 = vcmp.gt.f32.partialorder %v1002, 0.0
        %vm1007 = vcmp.gt.f32.partialorder %v1003, 0.0
        %vm1008 = vcmp.gt.f32.partialorder %v1004, 0.0
        %vm1009 = vcmp.gt.f32.partialorder %v1005, 0.0
        %v1010 = vmul.f32 %v1002, 1.442695
        %v1011 = vpow.pop %v1010
        %v1012 = vmul.f32 %v1003, 1.442695
        %v1013 = vpow.pop %v1012
        %v1014 = vmul.f32 %v1004, 1.442695
        %v1015 = vpow.pop %v1014
        %v1016 = vmul.f32 %v1005, 1.442695
        %v1017 = vpow.pop %v1016
        %v1018 = vsub.f32 %v1011, 1.0
        %v1019 = vsub.f32 %v1013, 1.0
        %v1020 = vsub.f32 %v1015, 1.0
        %v1021 = vsub.f32 %v1017, 1.0
        %v1022 = vmul.f32 %v1018, 1.6732632
        %v1023 = vmul.f32 %v1019, 1.6732632
        %v1024 = vmul.f32 %v1020, 1.6732632
        %v1025 = vmul.f32 %v1021, 1.6732632
        %v1026 = vsel %vm1006, %v1002, %v1022
        %v1027 = vsel %vm1007, %v1003, %v1023
        %v1028 = vsel %vm1008, %v1004, %v1024
        %v1029 = vsel %vm1009, %v1005, %v1025
        %v1030 = vmul.f32 %v1026, 1.050701
        %v1031 = vmul.f32 %v1027, 1.050701
        %v1032 = vmul.f32 %v1028, 1.050701
        %v1033 = vmul.f32 %v1029, 1.050701
        %v1034 = vld [vmem:[%s449] sm:$0xff]
        %v1035 = vld [vmem:[%s449 + $0x8] sm:$0xff]
        %v1036 = vadd.f32 %v1030, %v1034
        %v1037 = vadd.f32 %v1031, %v1035
        %v1038 = vadd.f32 %v1032, %v1034
        %v1039 = vadd.f32 %v1033, %v1035
        %v1040 = vld [vmem:[#allocation2] sm:$0x3]
        %v1041 = vmax.f32 %v1036, %v1037
        %v1042 = vrot.slane %v1041, 4
        %v1043 = vmax.f32 %v1041, %v1042
        %v1044 = vrot.slane %v1043, 2
        %v1045 = vmax.f32 %v1043, %v1044
        %v1046 = vrot.slane %v1045, 1
        %v1047 = vmax.f32 %v1045, %v1046
        %v1048 = vmax.f32 %v1038, %v1039
        %v1049 = vrot.slane %v1048, 4
        %v1050 = vmax.f32 %v1048, %v1049
        %v1051 = vrot.slane %v1050, 2
        %v1052 = vmax.f32 %v1050, %v1051
        %v1053 = vrot.slane %v1052, 1
        %v1054 = vmax.f32 %v1052, %v1053
        %vm1057 = vcmask 1041409
        %v1058 = vsel %vm1057, %v1054, %v1047
        %v1060 = vmax.f32 %v1040, %v1058
        %1061 = vst [vmem:[#allocation2] sm:$0x3] %v1060
        %p1062 = scmp.eq.s32.totalorder %s33, 1
        // Predicated region
        $region77: #{tpu_custom_call.1} parent=47 // pred_check
          %p1063 = pneg %p1062
        $region78: #{tpu_custom_call.1} parent=47 // pred_check_branch
          %1065 = sbr.rel (%p1063) target = $region80
        $region79: #{tpu_custom_call.1} parent=47 // pred_region
          %v1066 = vld [vmem:[#allocation2] sm:$0x3]
          %v1067 = vld [vmem:[#allocation13] sm:$0x1]
          %v1069 = vlaneseq
          %v1070 = vshrl.u32 %v1069, 7
          %v1071 = vsub.s32 0, %v1070
          %v1072 = vrot.slane %v1067, %v1071
          %v1074 = vmul.f32 %v1066, %v1072
          %vm1075 = vcmask 1041408
          %v1076 = vsel %vm1075, %v1074, 0.0
          %1077 = vadd.xlane.f32.xlu0 %v1076
          %v1078 = vpop.xlane.xlu0 %1077
          %v1079 = vld [vmem:[#allocation3] sm:$0x1]
          %v1081 = vlaneseq
          %v1082 = vshrl.u32 %v1081, 7
          %v1083 = vsub.s32 0, %v1082
          %v1084 = vrot.slane %v1079, %v1083
          %v1086 = vadd.f32 %v1078, %v1084
          %vm1087 = vcmask 1024
          %1088 = vst.msk [vmem:[#allocation14] sm:$0x3] %vm1087, %v1086
        $region80: #{tpu_custom_call.1} parent=47 // pred_fallthru
          _
        // Predicated region
        $region81: #{tpu_custom_call.1} parent=47 // pred_check
          %p1089 = pneg %p230
        $region82: #{tpu_custom_call.1} parent=47 // pred_check_branch
          %1091 = sbr.rel (%p1089) target = $region84
        $region83: #{tpu_custom_call.1} parent=47 // pred_region
          %s1093 = ssub.s32 32, 32
          %1094 = vsyncadd [#allocation6], %s1093
          %s1095 = smul.addr %s32, 32
          %s1096 = scalar_lea.hbm %s7, %s1095
          %s1098 = sshll.u32 [#allocation14], 4
          %s1099 = int_to_ptr.vmem [resolvable:$true] %s1098
          %1101 = dma.vmem_to_hbm [thread:$0]  %s1099, 32, %s1096, [#allocation6]
        $region84: #{tpu_custom_call.1} parent=47 // pred_fallthru
          _
        // Predicated region
        $region85: #{tpu_custom_call.1} parent=47 // pred_check
          %p1102 = pneg %p230
        $region86: #{tpu_custom_call.1} parent=47 // pred_check_branch
          %1104 = sbr.rel (%p1102) target = $region88
        $region87: #{tpu_custom_call.1} parent=47 // pred_region
          %1105 = dma.done [#allocation6], 32
        $region88: #{tpu_custom_call.1} parent=47 // pred_fallthru
          _
      $region48: #{tpu_custom_call.1} parent=5 // pred_fallthru
        _
      %p1106 = scmp.le.s32.totalorder 2, %s23
      // Predicated region
      $region89: #{tpu_custom_call.1} parent=5 // pred_check
        %p1107 = pneg %p1106
      $region90: #{tpu_custom_call.1} parent=5 // pred_check_branch
        %1109 = sbr.rel (%p1107) target = $region92
      $region91: #{tpu_custom_call.1} parent=5 // pred_region
        %s1110 = ssub.s32 %s23, 2
      $region92: #{tpu_custom_call.1} parent=5 // pred_fallthru
        _
    $region6: #{tpu_custom_call.1} parent=1 // loop_footer
      %s27 = sadd.s32 1, %s23
    $region7: #{tpu_custom_call.1} parent=1 // loop_footer_branch
      %22 = sbr.rel target = $region3
    $region8: #{tpu_custom_call.1} parent=1 // loop_exit
      _
    %1111 = vsyncpa [#allocation5], 1
    %s1112 = scalar_lea.sflag [#allocation5], 1
    %1113 = vsyncpa %s1112, 1
    %1114 = vsyncpa [#allocation8], 1
    %s1115 = scalar_lea.sflag [#allocation8], 1
    %1116 = vsyncpa %s1115, 1
    %1117 = vsyncpa [#allocation11], 1
    %1118 = vsyncpa [#allocation6], 1
    %s1119 = scalar_lea.sflag [#allocation6], 1
    %1120 = vsyncpa %s1119, 1

</llo_original>
